<compile_context>
chip_gen: v6e
topology: v6e:2x2x1
jax: 0.10.0
libtpu: 0.0.40
codegen_flags: <defaults>
</compile_context>

<pallas_src>
import functools

import jax
import jax.numpy as jnp
from jax.experimental import pallas as pl
from jax.experimental.pallas import tpu as pltpu

_MiB = 1024 * 1024


def _wce_kernel(logits_ref, tgt_ref, w_ref, out_ref, m_sc, s_sc, xt_sc, *,
                n_rows):
    """Weighted cross-entropy partial reduction with online LSE over V-chunks.

    logits_ref: (TN, TV) native dtype (f32 / bf16)
    tgt_ref:    (TN, 1)  int32 target class per row
    w_ref:      (TN, 1)  f32 per-row weight (0 for masked / ignore_index rows)
    out_ref:    (1, 16, 128) f32: sublanes 0-7 = partial num, 8-15 = partial den
    m_sc/s_sc/xt_sc: (TN, 1) f32 running max / running sum(exp) / target logit
    """
    i = pl.program_id(0)
    j = pl.program_id(1)
    nv = pl.num_programs(1)
    tn, tv = logits_ref.shape

    @pl.when(j == 0)
    def _():
        m_sc[...] = jnp.full_like(m_sc, -jnp.inf)
        s_sc[...] = jnp.zeros_like(s_sc)
        xt_sc[...] = jnp.zeros_like(xt_sc)

    x = logits_ref[...]                       # native dtype, no f32 copy in VMEM
    t = tgt_ref[...]                          # (TN, 1) int32

    # Chunk row-max in the native dtype (exact for bf16), online-merge in f32.
    m_loc = jnp.max(x, axis=-1, keepdims=True).astype(jnp.float32)
    m_prev = m_sc[...]
    m_new = jnp.maximum(m_prev, m_loc)
    alpha = jnp.exp(m_prev - m_new)           # first chunk: exp(-inf - m) == 0

    # exp and the running sum stay in f32 (accuracy); the cast fuses into the
    # elementwise chain rather than a separate pass.
    # TODO(synk): if a bundle dump shows VALU/XLU binding, offload this lane
    # sum (and the one-hot sum below) to the idle MXU via jnp.dot with a ones
    # matrix.
    p_sum = jnp.sum(jnp.exp(x.astype(jnp.float32) - m_new),
                    axis=-1, keepdims=True)
    s_sc[...] = alpha * s_sc[...] + p_sum
    m_sc[...] = m_new

    # Target-logit gather: compare/select in the native dtype, accumulate in
    # f32 (exact: at most one nonzero per row).
    lane_idx = j * tv + jax.lax.broadcasted_iota(jnp.int32, (1, tv), 1)
    sel = jnp.where(lane_idx == t, x, jnp.zeros_like(x))
    xt_sc[...] += jnp.sum(sel.astype(jnp.float32), axis=-1, keepdims=True)

    @pl.when(j == nv - 1)
    def _():
        w = w_ref[...]
        lse = jnp.log(s_sc[...]) + m_sc[...]
        nll = lse - xt_sc[...]                # (TN, 1) = -log p(target)
        # Ragged last row tile: rows >= n_rows hold stale VMEM (possibly
        # NaN/Inf) -> neutralize with a select (not a multiply).
        row_idx = i * tn + jax.lax.broadcasted_iota(jnp.int32, (tn, 1), 0)
        valid = row_idx < n_rows
        s_num = jnp.sum(jnp.where(valid, w * nll, 0.0))
        s_den = jnp.sum(jnp.where(valid, w, 0.0))
        # Merged (num, den) block: one output array -> one writeback per tile.
        sub = jax.lax.broadcasted_iota(jnp.int32, out_ref.shape, 1)
        out_ref[...] = jnp.where(sub < 8, s_num, s_den)


def _round_up(x, m):
    return ((x + m - 1) // m) * m


def _vmem_policy():
    """Generation-keyed (vmem_budget, vmem_limit)."""
    try:
        cap = getattr(pltpu.get_tpu_info(), "vmem_capacity_bytes", None)
    except Exception:
        cap = None
    if cap is not None and cap >= 96 * _MiB:     # v5e / v6e: 128 MiB VMEM
        return 48 * _MiB, 96 * _MiB
    return 22 * _MiB, 48 * _MiB                  # v7x (64 MiB) or unknown


def _choose_tiles(n_rows, vocab, in_itemsize, vmem_budget, max_tile_rows=4096):
    """Pick (tile_rows, tile_v) so the pipelined VMEM footprint fits the budget.

    Per-row cost: double-buffered logits chunk + ~3 f32 chunk-sized in-kernel
    temporaries + the lane-padded (TN,1) tgt/w side blocks (double-buffered)
    + 3 f32 scratch rows.
    """
    side_per_row = 2 * 2 * 128 * 4 + 3 * 128 * 4   # tgt/w blocks + m/s/xt scratch

    def per_row(tv):
        return 2 * tv * in_itemsize + 3 * tv * 4 + side_per_row

    tile_v = vocab
    rows = vmem_budget // per_row(tile_v)
    if rows < 64 and vocab % 128 == 0 and vocab > 128:
        # Huge-vocab corner: stream the vocab axis (online LSE) so row tiles
        # stay large and f32 temporaries stay chunk-sized.
        max_tv = max(128, (vmem_budget // 256 - side_per_row)
                     // (2 * in_itemsize + 12))
        tv, cand = 128, 128
        while cand <= min(vocab, max_tv):
            if vocab % cand == 0:
                tv = cand
            cand += 128
        tile_v = tv
        rows = vmem_budget // per_row(tile_v)
    # TODO(synk): a non-128-multiple huge vocab cannot be chunked (block last
    # dim must be a 128-multiple or the full dim); it falls back to full-V rows.
    rows = min(rows, max_tile_rows, _round_up(n_rows, 8))
    if n_rows > 8:
        # Keep >= 2 row tiles so dimension_semantics="parallel" can occupy both
        # v7x TensorCores (harmless on single-TC parts).
        rows = min(rows, _round_up(pl.cdiv(n_rows, 2), 8))
    rows = max(8, (rows // 8) * 8)
    return int(rows), int(tile_v)


def weight_cross_entropy_loss(logits, targets, *, vocab_size, eos_weight,
                              eos_id, loss_weight, max_tile_rows=4096):
    """Reproduces WeightCrossEntropy.forward for the G_LOGITS branch.

    logits:  (B, L, V) float32 or bfloat16 (streamed in original dtype)
    targets: (B, L)    int32   (also used as `seq` in the PyTorch module)
    Returns a scalar float32 loss.
    """
    B, L, V = logits.shape
    assert V == vocab_size

    # --- glue (plain JAX): EOS mask, shifted right by one with leading 1 ---
    seq = targets
    eos_cum = jnp.cumsum((seq == eos_id).astype(jnp.int32), axis=-1)
    mask = eos_cum == 0                                          # before first EOS
    mask = jnp.concatenate(
        [jnp.ones((B, 1), dtype=bool), mask[:, :-1]], axis=1)    # include EOS pos

    # nn.CrossEntropyLoss(weight=w, ignore_index=0): contributions only for
    # rows with target != 0, each scaled by w[t]; mean = sum(w*nll)/sum(w).
    # weight[0] = eos_weight matches the module (it never contributes because
    # ignore_index == 0).
    class_weight = jnp.ones((vocab_size,), jnp.float32).at[0].set(eos_weight)
    valid = mask & (targets != 0)
    row_w = jnp.where(valid, class_weight[targets], 0.0).astype(jnp.float32)

    N = B * L
    logits_f = logits.reshape(N, V)          # view; kernel streams native dtype
    tgt_f = targets.reshape(N, 1).astype(jnp.int32)
    w_f = row_w.reshape(N, 1)

    in_itemsize = jnp.dtype(logits.dtype).itemsize
    vmem_budget, vmem_limit = _vmem_policy()
    tile_rows, tile_v = _choose_tiles(N, V, in_itemsize, vmem_budget,
                                      max_tile_rows)
    grid_n = pl.cdiv(N, tile_rows)
    grid_v = V // tile_v
    n_padded = grid_n * tile_rows

    # Pad only the tiny per-row side inputs (padded rows carry weight 0 and
    # are additionally masked in-kernel).
    if n_padded != N:
        tgt_f = jnp.pad(tgt_f, ((0, n_padded - N), (0, 0)))
        w_f = jnp.pad(w_f, ((0, n_padded - N), (0, 0)))

    kernel = functools.partial(_wce_kernel, n_rows=N)

    cost = pl.CostEstimate(
        flops=int(6 * N * V),
        transcendentals=int(N * V),
        bytes_accessed=int(N * V * in_itemsize + 2 * n_padded * 4
                           + grid_n * 16 * 128 * 4),
    )

    # TODO(synk): consider pipeline_mode=pl.Buffered(3) on the logits spec on
    # v7x bf16 when compute-per-tile ~= DMA-per-tile.
    part = pl.pallas_call(
        kernel,
        out_shape=jax.ShapeDtypeStruct((grid_n, 16, 128), jnp.float32),
        grid_spec=pltpu.PrefetchScalarGridSpec(
            num_scalar_prefetch=0,
            grid=(grid_n, grid_v),
            in_specs=[
                pl.BlockSpec((tile_rows, tile_v), lambda i, j: (i, j)),
                pl.BlockSpec((tile_rows, 1), lambda i, j: (i, 0)),
                pl.BlockSpec((tile_rows, 1), lambda i, j: (i, 0)),
            ],
            out_specs=pl.BlockSpec((1, 16, 128), lambda i, j: (i, 0, 0)),
            scratch_shapes=[pltpu.VMEM((tile_rows, 1), jnp.float32)] * 3,
        ),
        compiler_params=pltpu.CompilerParams(
            dimension_semantics=("parallel", "arbitrary"),
            vmem_limit_bytes=vmem_limit),
        cost_estimate=cost,
    )(logits_f, tgt_f, w_f)

    num = jnp.sum(part[:, 0, 0])
    den = jnp.sum(part[:, 8, 0])
    # Guard the degenerate all-masked case (PyTorch would return NaN here).
    loss = jnp.where(den > 0, num / den, 0.0) * loss_weight
    return loss


def _reference_loss(logits, targets, *, vocab_size, eos_weight, eos_id,
                    loss_weight):
    """Pure-JAX reference mirroring torch.nn.CrossEntropyLoss semantics."""
    B, L, V = logits.shape
    eos_cum = jnp.cumsum((targets == eos_id).astype(jnp.int32), axis=-1)
    mask = eos_cum == 0
    mask = jnp.concatenate([jnp.ones((B, 1), dtype=bool), mask[:, :-1]], axis=1)
    class_weight = jnp.ones((vocab_size,), jnp.float32).at[0].set(eos_weight)
    valid = mask & (targets != 0)
    w = jnp.where(valid, class_weight[targets], 0.0)
    logp = jax.nn.log_softmax(logits.astype(jnp.float32), axis=-1)
    nll = -jnp.take_along_axis(logp, targets[..., None], axis=-1)[..., 0]
    return (jnp.sum(w * nll) / jnp.sum(w)) * loss_weight


if __name__ == "__main__":
    # Module config (deterministic, synthetic)
    vocab_size = 32
    eos_weight = 0.5
    eos_id = 0            # EOS token == ignore_index, as in the module
    loss_weight = 1.0

    # Small shapes: batch=2, seq=8, vocab=32
    B, L, V = 2, 8, vocab_size
    key = jax.random.PRNGKey(0)
    k1, k2 = jax.random.split(key)
    logits = jax.random.normal(k1, (B, L, V), dtype=jnp.float32)
    targets = jax.random.randint(k2, (B, L), 1, V, dtype=jnp.int32)
    # plant EOS tokens so the cumsum mask actually truncates sequences
    targets = targets.at[0, 5].set(eos_id).at[1, 3].set(eos_id)

    # f32 path
    loss = weight_cross_entropy_loss(
        logits, targets, vocab_size=vocab_size, eos_weight=eos_weight,
        eos_id=eos_id, loss_weight=loss_weight)
    loss = jax.block_until_ready(loss)
    ref = _reference_loss(
        logits, targets, vocab_size=vocab_size, eos_weight=eos_weight,
        eos_id=eos_id, loss_weight=loss_weight)
    ref = jax.block_until_ready(ref)
    assert jnp.allclose(loss, ref, rtol=1e-5, atol=1e-5), (loss, ref)

    # bf16 path: logits stream straight into the kernel (no wrapper f32 copy,
    # native-dtype max / compare-select in-kernel, f32 exp + accumulation)
    logits_bf16 = logits.astype(jnp.bfloat16)
    loss_bf = jax.block_until_ready(weight_cross_entropy_loss(
        logits_bf16, targets, vocab_size=vocab_size, eos_weight=eos_weight,
        eos_id=eos_id, loss_weight=loss_weight))
    ref_bf = jax.block_until_ready(_reference_loss(
        logits_bf16, targets, vocab_size=vocab_size, eos_weight=eos_weight,
        eos_id=eos_id, loss_weight=loss_weight))
    assert jnp.allclose(loss_bf, ref_bf, rtol=1e-4, atol=1e-4), (loss_bf, ref_bf)

    print("KERNEL_OK")
</pallas_src>

<mosaic_0001>
module attributes {stable_mosaic.version = 11 : i64} {
  func.func @_wce_kernel(%arg0: i32, %arg1: i32, %arg2: memref<8x32xf32, #tpu.memory_space<vmem>>, %arg3: memref<8x1xi32, #tpu.memory_space<vmem>>, %arg4: memref<8x1xf32, #tpu.memory_space<vmem>>, %arg5: memref<1x16x128xf32, #tpu.memory_space<vmem>>, %arg6: memref<8x1xf32, #tpu.memory_space<vmem>>, %arg7: memref<8x1xf32, #tpu.memory_space<vmem>>, %arg8: memref<8x1xf32, #tpu.memory_space<vmem>>) attributes {dimension_semantics = [#tpu.dimension_semantics<parallel>, #tpu.dimension_semantics<arbitrary>], iteration_bounds = array<i64: 2, 1>, scalar_prefetch = 0 : i64, scratch_operands = 3 : i64, tpu.core_type = #tpu.core_type<tc>, window_params = [{transform_indices = @transform_0, window_bounds = array<i64: 8, 32>}, {transform_indices = @transform_1, window_bounds = array<i64: 8, 1>}, {transform_indices = @transform_2, window_bounds = array<i64: 8, 1>}, {transform_indices = @transform_3, window_bounds = array<i64: 1, 16, 128>}]} {
    %c0_i32 = arith.constant 0 : i32
    %0 = arith.cmpi eq, %arg1, %c0_i32 : i32
    %1 = arith.extui %0 : i1 to i32
    %c0_i32_0 = arith.constant 0 : i32
    %2 = arith.cmpi ne, %1, %c0_i32_0 : i32
    scf.if %2 {
      %cst_21 = arith.constant 0xFF800000 : f32
      %38 = vector.broadcast %cst_21 : f32 to vector<8x1xf32>
      %c0_22 = arith.constant 0 : index
      %c0_23 = arith.constant 0 : index
      %39 = vector.load %arg6[%c0_22, %c0_23] : memref<8x1xf32, #tpu.memory_space<vmem>>, vector<8x1xf32>
      tpu.vector_store %arg6[%c0_22, %c0_23], %38 {strides = array<i32>} : memref<8x1xf32, #tpu.memory_space<vmem>>, vector<8x1xf32>,
      %cst_24 = arith.constant 0.000000e+00 : f32
      %40 = vector.broadcast %cst_24 : f32 to vector<8x1xf32>
      %c0_25 = arith.constant 0 : index
      %c0_26 = arith.constant 0 : index
      %41 = vector.load %arg7[%c0_25, %c0_26] : memref<8x1xf32, #tpu.memory_space<vmem>>, vector<8x1xf32>
      tpu.vector_store %arg7[%c0_25, %c0_26], %40 {strides = array<i32>} : memref<8x1xf32, #tpu.memory_space<vmem>>, vector<8x1xf32>,
      %cst_27 = arith.constant 0.000000e+00 : f32
      %42 = vector.broadcast %cst_27 : f32 to vector<8x1xf32>
      %c0_28 = arith.constant 0 : index
      %c0_29 = arith.constant 0 : index
      %43 = vector.load %arg8[%c0_28, %c0_29] : memref<8x1xf32, #tpu.memory_space<vmem>>, vector<8x1xf32>
      tpu.vector_store %arg8[%c0_28, %c0_29], %42 {strides = array<i32>} : memref<8x1xf32, #tpu.memory_space<vmem>>, vector<8x1xf32>,
    } else {
    }
    %c0 = arith.constant 0 : index
    %c0_1 = arith.constant 0 : index
    %3 = vector.load %arg2[%c0, %c0_1] : memref<8x32xf32, #tpu.memory_space<vmem>>, vector<8x32xf32>
    %c0_2 = arith.constant 0 : index
    %c0_3 = arith.constant 0 : index
    %4 = vector.load %arg3[%c0_2, %c0_3] : memref<8x1xi32, #tpu.memory_space<vmem>>, vector<8x1xi32>
    %cst = arith.constant dense<0xFF800000> : vector<8xf32>
    %5 = vector.multi_reduction <maximumf>, %3, %cst [1] : vector<8x32xf32> to vector<8xf32>
    %6 = vector.shape_cast %5 : vector<8xf32> to vector<8x1xf32>
    %c0_4 = arith.constant 0 : index
    %c0_5 = arith.constant 0 : index
    %7 = vector.load %arg6[%c0_4, %c0_5] : memref<8x1xf32, #tpu.memory_space<vmem>>, vector<8x1xf32>
    %8 = arith.maximumf %7, %6 : vector<8x1xf32>
    %9 = arith.subf %7, %8 : vector<8x1xf32>
    %10 = math.exp %9 : vector<8x1xf32>
    %11 = vector.broadcast %8 : vector<8x1xf32> to vector<8x32xf32>
    %12 = arith.subf %3, %11 : vector<8x32xf32>
    %13 = math.exp %12 : vector<8x32xf32>
    %cst_6 = arith.constant dense<0.000000e+00> : vector<8xf32>
    %14 = vector.multi_reduction <add>, %13, %cst_6 [1] : vector<8x32xf32> to vector<8xf32>
    %15 = vector.shape_cast %14 : vector<8xf32> to vector<8x1xf32>
    %c0_7 = arith.constant 0 : index
    %c0_8 = arith.constant 0 : index
    %16 = vector.load %arg7[%c0_7, %c0_8] : memref<8x1xf32, #tpu.memory_space<vmem>>, vector<8x1xf32>
    %17 = arith.mulf %10, %16 : vector<8x1xf32>
    %18 = arith.addf %17, %15 : vector<8x1xf32>
    %c0_9 = arith.constant 0 : index
    %c0_10 = arith.constant 0 : index
    %19 = vector.load %arg7[%c0_9, %c0_10] : memref<8x1xf32, #tpu.memory_space<vmem>>, vector<8x1xf32>
    tpu.vector_store %arg7[%c0_9, %c0_10], %18 {strides = array<i32>} : memref<8x1xf32, #tpu.memory_space<vmem>>, vector<8x1xf32>,
    %c0_11 = arith.constant 0 : index
    %c0_12 = arith.constant 0 : index
    %20 = vector.load %arg6[%c0_11, %c0_12] : memref<8x1xf32, #tpu.memory_space<vmem>>, vector<8x1xf32>
    tpu.vector_store %arg6[%c0_11, %c0_12], %8 {strides = array<i32>} : memref<8x1xf32, #tpu.memory_space<vmem>>, vector<8x1xf32>,
    %c32_i32 = arith.constant 32 : i32
    %21 = arith.muli %arg1, %c32_i32 : i32
    %22 = tpu.iota {dimensions = array<i32: 1>} : vector<1x32xi32>
    %23 = vector.broadcast %21 : i32 to vector<1x32xi32>
    %24 = arith.addi %23, %22 : vector<1x32xi32>
    %25 = vector.broadcast %24 : vector<1x32xi32> to vector<8x32xi32>
    %26 = vector.broadcast %4 : vector<8x1xi32> to vector<8x32xi32>
    %27 = arith.cmpi eq, %25, %26 : vector<8x32xi32>
    %cst_13 = arith.constant 0.000000e+00 : f32
    %28 = vector.broadcast %cst_13 : f32 to vector<8x32xf32>
    %29 = arith.select %27, %3, %28 : vector<8x32xi1>, vector<8x32xf32>
    %c0_14 = arith.constant 0 : index
    %c0_15 = arith.constant 0 : index
    %30 = vector.load %arg8[%c0_14, %c0_15] : memref<8x1xf32, #tpu.memory_space<vmem>>, vector<8x1xf32>
    %cst_16 = arith.constant dense<0.000000e+00> : vector<8xf32>
    %31 = vector.multi_reduction <add>, %29, %cst_16 [1] : vector<8x32xf32> to vector<8xf32>
    %32 = vector.shape_cast %31 : vector<8xf32> to vector<8x1xf32>
    %33 = arith.addf %30, %32 : vector<8x1xf32>
    %c0_17 = arith.constant 0 : index
    %c0_18 = arith.constant 0 : index
    %34 = vector.load %arg8[%c0_17, %c0_18] : memref<8x1xf32, #tpu.memory_space<vmem>>, vector<8x1xf32>
    tpu.vector_store %arg8[%c0_17, %c0_18], %33 {strides = array<i32>} : memref<8x1xf32, #tpu.memory_space<vmem>>, vector<8x1xf32>,
    %c0_i32_19 = arith.constant 0 : i32
    %35 = arith.cmpi eq, %arg1, %c0_i32_19 : i32
    %36 = arith.extui %35 : i1 to i32
    %c0_i32_20 = arith.constant 0 : i32
    %37 = arith.cmpi ne, %36, %c0_i32_20 : i32
    scf.if %37 {
      %c0_21 = arith.constant 0 : index
      %c0_22 = arith.constant 0 : index
      %38 = vector.load %arg4[%c0_21, %c0_22] : memref<8x1xf32, #tpu.memory_space<vmem>>, vector<8x1xf32>
      %c0_23 = arith.constant 0 : index
      %c0_24 = arith.constant 0 : index
      %39 = vector.load %arg7[%c0_23, %c0_24] : memref<8x1xf32, #tpu.memory_space<vmem>>, vector<8x1xf32>
      %40 = math.log %39 : vector<8x1xf32>
      %c0_25 = arith.constant 0 : index
      %c0_26 = arith.constant 0 : index
      %41 = vector.load %arg6[%c0_25, %c0_26] : memref<8x1xf32, #tpu.memory_space<vmem>>, vector<8x1xf32>
      %42 = arith.addf %40, %41 : vector<8x1xf32>
      %c0_27 = arith.constant 0 : index
      %c0_28 = arith.constant 0 : index
      %43 = vector.load %arg8[%c0_27, %c0_28] : memref<8x1xf32, #tpu.memory_space<vmem>>, vector<8x1xf32>
      %44 = arith.subf %42, %43 : vector<8x1xf32>
      %c8_i32 = arith.constant 8 : i32
      %45 = arith.muli %arg0, %c8_i32 : i32
      %46 = tpu.iota {dimensions = array<i32: 0>} : vector<8x1xi32>
      %47 = vector.broadcast %45 : i32 to vector<8x1xi32>
      %48 = arith.addi %47, %46 : vector<8x1xi32>
      %c16_i32 = arith.constant 16 : i32
      %49 = vector.broadcast %c16_i32 : i32 to vector<8x1xi32>
      %50 = arith.cmpi slt, %48, %49 : vector<8x1xi32>
      %51 = arith.mulf %38, %44 : vector<8x1xf32>
      %cst_29 = arith.constant 0.000000e+00 : f32
      %52 = vector.broadcast %cst_29 : f32 to vector<8x1xf32>
      %53 = arith.select %50, %51, %52 : vector<8x1xi1>, vector<8x1xf32>
      %54 = vector.shape_cast %53 : vector<8x1xf32> to vector<1x8x1xf32>
      %cst_30 = arith.constant dense<0.000000e+00> : vector<1xf32>
      %55 = vector.multi_reduction <add>, %54, %cst_30 [1, 2] : vector<1x8x1xf32> to vector<1xf32>
      %56 = vector.shape_cast %55 : vector<1xf32> to vector<1x1x1xf32>
      %57 = vector.extract %56[0, 0, 0] : f32 from vector<1x1x1xf32>
      %cst_31 = arith.constant 0.000000e+00 : f32
      %58 = vector.broadcast %cst_31 : f32 to vector<8x1xf32>
      %59 = arith.select %50, %38, %58 : vector<8x1xi1>, vector<8x1xf32>
      %60 = vector.shape_cast %59 : vector<8x1xf32> to vector<1x8x1xf32>
      %cst_32 = arith.constant dense<0.000000e+00> : vector<1xf32>
      %61 = vector.multi_reduction <add>, %60, %cst_32 [1, 2] : vector<1x8x1xf32> to vector<1xf32>
      %62 = vector.shape_cast %61 : vector<1xf32> to vector<1x1x1xf32>
      %63 = vector.extract %62[0, 0, 0] : f32 from vector<1x1x1xf32>
      %64 = tpu.iota {dimensions = array<i32: 1>} : vector<1x16x128xi32>
      %c8_i32_33 = arith.constant 8 : i32
      %65 = vector.broadcast %c8_i32_33 : i32 to vector<1x16x128xi32>
      %66 = arith.cmpi slt, %64, %65 : vector<1x16x128xi32>
      %67 = vector.broadcast %57 : f32 to vector<1x16x128xf32>
      %68 = vector.broadcast %63 : f32 to vector<1x16x128xf32>
      %69 = arith.select %66, %67, %68 : vector<1x16x128xi1>, vector<1x16x128xf32>
      %c0_34 = arith.constant 0 : index
      %c0_35 = arith.constant 0 : index
      %c0_36 = arith.constant 0 : index
      %70 = vector.load %arg5[%c0_34, %c0_35, %c0_36] : memref<1x16x128xf32, #tpu.memory_space<vmem>>, vector<1x16x128xf32>
      tpu.vector_store %arg5[%c0_34, %c0_35, %c0_36], %69 {strides = array<i32>} : memref<1x16x128xf32, #tpu.memory_space<vmem>>, vector<1x16x128xf32>,
    } else {
    }
    return
  }
  func.func @transform_0(%arg0: i32, %arg1: i32) -> (i32, i32) {
    %c0_i32 = arith.constant 0 : i32
    return %arg0, %arg1 : i32, i32
  }
  func.func @transform_1(%arg0: i32, %arg1: i32) -> (i32, i32) {
    %c0_i32 = arith.constant 0 : i32
    %c0_i32_0 = arith.constant 0 : i32
    return %arg0, %c0_i32 : i32, i32
  }
  func.func @transform_2(%arg0: i32, %arg1: i32) -> (i32, i32) {
    %c0_i32 = arith.constant 0 : i32
    %c0_i32_0 = arith.constant 0 : i32
    return %arg0, %c0_i32 : i32, i32
  }
  func.func @transform_3(%arg0: i32, %arg1: i32) -> (i32, i32, i32) {
    %c0_i32 = arith.constant 0 : i32
    %c0_i32_0 = arith.constant 0 : i32
    %c0_i32_1 = arith.constant 0 : i32
    return %arg0, %c0_i32, %c0_i32_0 : i32, i32, i32
  }
}

</mosaic_0001>

<llo_original>
// kernel: tpu_custom_call.1
$region0: #{tpu_custom_call.1}
  #allocation0 [shape = 'u32[]', space=smem, size = 0x4, offset = 0x4, fixed_abs, tag = 'smem constant byte address 0x4 - core index']
  #allocation1 [shape = 'u32[144,128]{1,0:T(1,128)}', space=vmem, size = 0x12000, scoped, tag = 'internal scratch']
  #allocation2 [shape = 'f32[8,1]{1,0:T(8,128)}', space=vmem, size = 0x1000, scoped, tag = 'scratch operand']
  #allocation3 [shape = 'f32[8,1]{1,0:T(8,128)}', space=vmem, size = 0x1000, scoped, tag = 'scratch operand']
  #allocation4 [shape = 'f32[8,1]{1,0:T(8,128)}', space=vmem, size = 0x1000, scoped, tag = 'scratch operand']
  %s0 = inlined_call_operand.vmem [shape: f32[16,32], index: 0, kind: input, shape index: {}]
  %s1 = inlined_call_operand.vmem [shape: s32[16,1], index: 1, kind: input, shape index: {}]
  %s2 = inlined_call_operand.vmem [shape: f32[16,1], index: 2, kind: input, shape index: {}]
  %s3 = inlined_call_operand.hbm [shape: f32[2,16,128], index: 3, kind: output, shape index: {}]
  %s4 = sld [smem:[#allocation0]]
  $region53: #{tpu_custom_call.1} parent=0
    _
  %s6 = ssub.s32 1, %s4
  %s7 = scalar_select 0, %s6, %s4
  $region1: #{tpu_custom_call.1} parent=0
    #allocation5 [shape = 'u8[16384]{0}', space=vmem, size = 0x4000, scoped, tag = 'output window, operand 0']
    #allocation6 [shape = 's32[2]{0}', space=sflag, size = 0x8, scoped, tag = 'scoped memory for tpu_custom_call.1']
    %8 = vsyncpa [#allocation6], 0
    %s9 = scalar_lea.sflag [#allocation6], 1
    %10 = vsyncpa %s9, 0
    loop: start=0, step=1, limit=4
    $region2: #{tpu_custom_call.1} parent=1 // loop_pre_header
      _
    $region3: #{tpu_custom_call.1} parent=1 // loop_header
      %s12 = sphi 0, %s16
      %p13 = scmp.ge.s32.totalorder %s12, 4
      %s19 = sphi 0, %s31
      %s20 = sphi 0, %s27
      %s21 = sphi 0, %s19
      %s22 = sphi 0, %s20
      %s23 = sphi 0, %s21
      %s24 = sphi 0, %s22
      %s36 = sphi 0, %s38
      %s39 = sphi 0, %s36
      %s40 = sphi 0, %s39
      %s56 = sphi 0, %s40
      %s62 = sphi 0, %s64
      %s65 = sphi 0, %s62
      %s66 = sphi 0, %s65
      %s82 = sphi 0, %s66
      %s88 = sphi 0, %s90
      %s91 = sphi 0, %s88
      %s92 = sphi 0, %s91
      %s108 = sphi 0, %s92
      %s114 = sphi 0, %s116
      %s117 = sphi 0, %s114
      %s118 = sphi 0, %s117
      %s134 = sphi 0, %s118
    $region4: #{tpu_custom_call.1} parent=1 // loop_header_branch
      %15 = sbr.rel (%p13) target = $region8
    $region5: #{tpu_custom_call.1} parent=1 // loop_body
      %s17 = ssub.s32 %s12, 1
      %s18 = ssub.s32 %s12, 2
      %s25 = sadd.s32 1, %s20
      %p26 = scmp.ge.s32.totalorder %s25, 1
      %s27 = scalar_select %p26, 0, %s25
      %s28 = sadd.s32 1, %s19
      %s29 = scalar_select %p26, %s28, %s19
      %p30 = scmp.ge.s32.totalorder %s29, 2
      %s31 = scalar_select %p30, 0, %s29
      %s32 = ssub.s32 %s19, %s31
      %s33 = ssub.s32 %s20, %s27
      %s34 = sor.u32 %s32, %s33
      %p35 = scmp.eq.s32.totalorder %s34, 0
      %s37 = sadd.s32 %s36, 1
      %s38 = scalar_select %p35, %s36, %s37
      %p41 = pneg %p35
      %p42 = scmp.eq.s32.totalorder %s12, 1
      %p43 = por %p41, %p42
      %p44 = scmp.ne.s32.totalorder %s36, %s39
      %p45 = scmp.eq.s32.totalorder %s12, 0
      %p46 = por %p44, %p45
      %p47 = scmp.ne.s32.totalorder %s36, %s39
      %p48 = scmp.eq.s32.totalorder %s17, 1
      %p49 = por %p47, %p48
      %p50 = scmp.ne.s32.totalorder %s39, %s40
      %p51 = scmp.eq.s32.totalorder %s17, 0
      %p52 = por %p50, %p51
      %p53 = scmp.ne.s32.totalorder %s39, %s40
      %p54 = scmp.eq.s32.totalorder %s18, 1
      %p55 = por %p53, %p54
      %p57 = scmp.ne.s32.totalorder %s40, %s56
      %p58 = scmp.eq.s32.totalorder %s18, 0
      %p59 = por %p57, %p58
      %s60 = ssub.s32 %s19, %s31
      %p61 = scmp.eq.s32.totalorder %s60, 0
      %s63 = sadd.s32 %s62, 1
      %s64 = scalar_select %p61, %s62, %s63
      %p67 = pneg %p61
      %p68 = scmp.eq.s32.totalorder %s12, 1
      %p69 = por %p67, %p68
      %p70 = scmp.ne.s32.totalorder %s62, %s65
      %p71 = scmp.eq.s32.totalorder %s12, 0
      %p72 = por %p70, %p71
      %p73 = scmp.ne.s32.totalorder %s62, %s65
      %p74 = scmp.eq.s32.totalorder %s17, 1
      %p75 = por %p73, %p74
      %p76 = scmp.ne.s32.totalorder %s65, %s66
      %p77 = scmp.eq.s32.totalorder %s17, 0
      %p78 = por %p76, %p77
      %p79 = scmp.ne.s32.totalorder %s65, %s66
      %p80 = scmp.eq.s32.totalorder %s18, 1
      %p81 = por %p79, %p80
      %p83 = scmp.ne.s32.totalorder %s66, %s82
      %p84 = scmp.eq.s32.totalorder %s18, 0
      %p85 = por %p83, %p84
      %s86 = ssub.s32 %s19, %s31
      %p87 = scmp.eq.s32.totalorder %s86, 0
      %s89 = sadd.s32 %s88, 1
      %s90 = scalar_select %p87, %s88, %s89
      %p93 = pneg %p87
      %p94 = scmp.eq.s32.totalorder %s12, 1
      %p95 = por %p93, %p94
      %p96 = scmp.ne.s32.totalorder %s88, %s91
      %p97 = scmp.eq.s32.totalorder %s12, 0
      %p98 = por %p96, %p97
      %p99 = scmp.ne.s32.totalorder %s88, %s91
      %p100 = scmp.eq.s32.totalorder %s17, 1
      %p101 = por %p99, %p100
      %p102 = scmp.ne.s32.totalorder %s91, %s92
      %p103 = scmp.eq.s32.totalorder %s17, 0
      %p104 = por %p102, %p103
      %p105 = scmp.ne.s32.totalorder %s91, %s92
      %p106 = scmp.eq.s32.totalorder %s18, 1
      %p107 = por %p105, %p106
      %p109 = scmp.ne.s32.totalorder %s92, %s108
      %p110 = scmp.eq.s32.totalorder %s18, 0
      %p111 = por %p109, %p110
      %s112 = ssub.s32 %s19, %s31
      %p113 = scmp.eq.s32.totalorder %s112, 0
      %s115 = sadd.s32 %s114, 1
      %s116 = scalar_select %p113, %s114, %s115
      %p119 = pneg %p113
      %p120 = scmp.eq.s32.totalorder %s12, 1
      %p121 = por %p119, %p120
      %p122 = scmp.ne.s32.totalorder %s114, %s117
      %p123 = scmp.eq.s32.totalorder %s12, 0
      %p124 = por %p122, %p123
      %p125 = scmp.ne.s32.totalorder %s114, %s117
      %p126 = scmp.eq.s32.totalorder %s17, 1
      %p127 = por %p125, %p126
      %p128 = scmp.ne.s32.totalorder %s117, %s118
      %p129 = scmp.eq.s32.totalorder %s17, 0
      %p130 = por %p128, %p129
      %p131 = scmp.ne.s32.totalorder %s117, %s118
      %p132 = scmp.eq.s32.totalorder %s18, 1
      %p133 = por %p131, %p132
      %p135 = scmp.ne.s32.totalorder %s118, %s134
      %p136 = scmp.eq.s32.totalorder %s18, 0
      %p137 = por %p135, %p136
      %p138 = scmp.le.s32.totalorder 1, %s12
      %p139 = scmp.lt.s32.totalorder %s12, 3
      %p140 = pnand %p138, %p139
      %p141 = pneg %p140
      // Predicated region
      $region9: #{tpu_custom_call.1} parent=5 // pred_check
        _
      $region10: #{tpu_custom_call.1} parent=5 // pred_check_branch
        %143 = sbr.rel (%p140) target = $region12
      $region11: #{tpu_custom_call.1} parent=5 // pred_region
        %s144 = ssub.s32 %s12, 1
      $region12: #{tpu_custom_call.1} parent=5 // pred_fallthru
        _
      %p145 = scmp.lt.s32.totalorder %s12, 2
      // Predicated region
      $region13: #{tpu_custom_call.1} parent=5 // pred_check
        %p146 = pneg %p145
      $region14: #{tpu_custom_call.1} parent=5 // pred_check_branch
        %148 = sbr.rel (%p146) target = $region16
      $region15: #{tpu_custom_call.1} parent=5 // pred_region
        // Predicated region
        $region17: #{tpu_custom_call.1} parent=15 // pred_check
          %p149 = pneg %p46
        $region18: #{tpu_custom_call.1} parent=15 // pred_check_branch
          %151 = sbr.rel (%p149) target = $region20
        $region19: #{tpu_custom_call.1} parent=15 // pred_region
          %p152 = scmp.lt.s32.totalorder %s19, 1
          %s153 = scalar_select %p152, %s19, 1
          %p154 = scmp.lt.s32.totalorder %s20, 0
          %s155 = scalar_select %p154, %s20, 0
          %s156 = sadd.s32 %s155, %s153
          %s157 = smul.addr %s156, 8
          %s158 = scalar_lea.vmem %s0, %s157
        $region20: #{tpu_custom_call.1} parent=15 // pred_fallthru
          _
        // Predicated region
        $region21: #{tpu_custom_call.1} parent=15 // pred_check
          %p159 = pneg %p72
        $region22: #{tpu_custom_call.1} parent=15 // pred_check_branch
          %161 = sbr.rel (%p159) target = $region24
        $region23: #{tpu_custom_call.1} parent=15 // pred_region
          %p162 = scmp.lt.s32.totalorder %s19, 1
          %s163 = scalar_select %p162, %s19, 1
          %s164 = smul.addr %s163, 8
          %s165 = scalar_lea.vmem %s1, %s164
        $region24: #{tpu_custom_call.1} parent=15 // pred_fallthru
          _
        // Predicated region
        $region25: #{tpu_custom_call.1} parent=15 // pred_check
          %p166 = pneg %p98
        $region26: #{tpu_custom_call.1} parent=15 // pred_check_branch
          %168 = sbr.rel (%p166) target = $region28
        $region27: #{tpu_custom_call.1} parent=15 // pred_region
          %p169 = scmp.lt.s32.totalorder %s19, 1
          %s170 = scalar_select %p169, %s19, 1
          %s171 = smul.addr %s170, 8
          %s172 = scalar_lea.vmem %s2, %s171
        $region28: #{tpu_custom_call.1} parent=15 // pred_fallthru
          _
      $region16: #{tpu_custom_call.1} parent=5 // pred_fallthru
        _
      %p173 = scmp.le.s32.totalorder 1, %s12
      %p174 = scmp.lt.s32.totalorder %s12, 3
      %p175 = pnand %p173, %p174
      %p176 = pneg %p175
      // Predicated region
      $region29: #{tpu_custom_call.1} parent=5 // pred_check
        _
      $region30: #{tpu_custom_call.1} parent=5 // pred_check_branch
        %178 = sbr.rel (%p175) target = $region32
      $region31: #{tpu_custom_call.1} parent=5 // pred_region
        %s179 = ssub.s32 %s12, 1
        %p180 = scmp.lt.s32.totalorder %s21, 1
        %s181 = scalar_select %p180, %s21, 1
        %p182 = scmp.lt.s32.totalorder %s22, 0
        %s183 = scalar_select %p182, %s22, 0
        %s184 = sadd.s32 %s183, %s181
        %s185 = smul.addr %s184, 8
        %s186 = scalar_lea.vmem %s0, %s185
        %p187 = pneg %p52
        %p188 = pneg %p49
        %p189 = scmp.lt.s32.totalorder %s21, 1
        %s190 = scalar_select %p189, %s21, 1
        %s191 = smul.addr %s190, 8
        %s192 = scalar_lea.vmem %s1, %s191
        %p193 = pneg %p78
        %p194 = pneg %p75
        %p195 = scmp.lt.s32.totalorder %s21, 1
        %s196 = scalar_select %p195, %s21, 1
        %s197 = smul.addr %s196, 8
        %s198 = scalar_lea.vmem %s2, %s197
        %p199 = pneg %p104
        %p200 = pneg %p101
        %p201 = pneg %p130
        %p202 = pneg %p127
        %s203 = sand.u32 %s117, 1
        %s204 = scalar_lea.sflag [#allocation6], %s203
        %s205 = sand.u32 %s117, 1
        %s206 = smul.addr %s205, 16
        %s207 = scalar_lea.vmem [#allocation5], %s206
        %p208 = scmp.lt.s32.totalorder %s21, 1
        %s209 = scalar_select %p208, %s21, 1
        %p210 = scmp.lt.s32.totalorder %s22, 0
        %s211 = scalar_select %p210, %s22, 0
        %s212 = sadd.s32 %s211, %s209
        %s213 = smul.addr %s212, 8
        %s214 = scalar_lea.vmem %s0, %s213
        %p215 = scmp.lt.s32.totalorder %s21, 1
        %s216 = scalar_select %p215, %s21, 1
        %s217 = smul.addr %s216, 8
        %s218 = scalar_lea.vmem %s1, %s217
        %p219 = scmp.lt.s32.totalorder %s21, 1
        %s220 = scalar_select %p219, %s21, 1
        %s221 = smul.addr %s220, 8
        %s222 = scalar_lea.vmem %s2, %s221
        %p223 = scmp.eq.s32.totalorder %s22, 0
        // Predicated region
        $region33: #{tpu_custom_call.1} parent=31 // pred_check
          %p224 = pneg %p223
        $region34: #{tpu_custom_call.1} parent=31 // pred_check_branch
          %226 = sbr.rel (%p224) target = $region36
        $region35: #{tpu_custom_call.1} parent=31 // pred_region
          %vm227 = vcmask 7168
          %228 = vst.msk [vmem:[#allocation2] sm:$0xff] %vm227, -inf
          %229 = vst.msk [vmem:[#allocation3] sm:$0xff] %vm227, 0.0
          %230 = vst.msk [vmem:[#allocation4] sm:$0xff] %vm227, 0.0
        $region36: #{tpu_custom_call.1} parent=31 // pred_fallthru
          _
        %v231 = vld [vmem:[%s214] sm:$0xff]
        %v232 = vld [vmem:[%s218] sm:$0xff]
        %vm233 = vcmask 261120
        %v234 = vsel %vm233, %v231, -inf
        %235 = vmax.xlane.f32.xlu0 %v234
        %v236 = vpop.xlane.xlu0 %235
        %v237 = vld [vmem:[#allocation2] sm:$0xff]
        %v238 = vmax.f32 %v237, %v236
        %v239 = vsub.f32 %v237, %v238
        %v240 = vmul.f32 %v239, 1.442695
        %v241 = vpow.pop %v240
        %243 = vset.pattern.permute.xlu0 0
        %244 = vperm.xlu0 %243, %v238
        %v245 = vpop.permute.xlu0 %244
        %v247 = vsub.f32 %v231, %v245
        %v248 = vmul.f32 %v247, 1.442695
        %v249 = vpow.pop %v248
        %v250 = vsel %vm233, %v249, 0.0
        %251 = vadd.xlane.f32.xlu0 %v250
        %v252 = vpop.xlane.xlu0 %251
        %v253 = vld [vmem:[#allocation3] sm:$0xff]
        %v254 = vmul.f32 %v241, %v253
        %v255 = vadd.f32 %v254, %v252
        %vm256 = vcmask 7168
        %257 = vst.msk [vmem:[#allocation3] sm:$0xff] %vm256, %v255
        %258 = vst.msk [vmem:[#allocation2] sm:$0xff] %vm256, %v238
        %s259 = smul.u32 %s22, 32
        %v260 = vlaneseq
        %v261 = vand.u32 %v260, 127
        %v262 = vstv %s259
        %v263 = vadd.s32 %v262, %v261
        %264 = vset.pattern.permute.xlu0 0
        %265 = vperm.xlu0 %264, %v232
        %v266 = vpop.permute.xlu0 %265
        %vm267 = vcmp.eq.s32.totalorder %v263, %v266
        %v268 = vsel %vm267, %v231, 0.0
        %v269 = vld [vmem:[#allocation4] sm:$0xff]
        %v270 = vsel %vm233, %v268, 0.0
        %271 = vadd.xlane.f32.xlu0 %v270
        %v272 = vpop.xlane.xlu0 %271
        %v273 = vadd.f32 %v269, %v272
        %274 = vst.msk [vmem:[#allocation4] sm:$0xff] %vm256, %v273
        // Predicated region
        $region37: #{tpu_custom_call.1} parent=31 // pred_check
          %p275 = pneg %p223
        $region38: #{tpu_custom_call.1} parent=31 // pred_check_branch
          %277 = sbr.rel (%p275) target = $region40
        $region39: #{tpu_custom_call.1} parent=31 // pred_region
          %v278 = vld [vmem:[%s222] sm:$0xff]
          %v279 = vld [vmem:[#allocation3] sm:$0xff]
          %v280 = vlog2.pop %v279
          %v281 = vmul.f32 %v280, 0.6931472
          %v282 = vld [vmem:[#allocation2] sm:$0xff]
          %v283 = vadd.f32 %v281, %v282
          %v284 = vld [vmem:[#allocation4] sm:$0xff]
          %v285 = vsub.f32 %v283, %v284
          %s286 = smul.u32 %s21, 8
          %v287 = vlaneseq
          %v288 = vshrl.u32 %v287, 7
          %v289 = vstv %s286
          %v290 = vadd.s32 %v289, %v288
          %vm291 = vcmp.lt.s32.totalorder %v290, 16
          %v292 = vmul.f32 %v278, %v285
          %v293 = vsel %vm291, %v292, 0.0
          %v294 = vsel %vm256, %v293, 0.0
          %295 = vadd.xlane.f32.xlu0 %v294
          %v296 = vpop.xlane.xlu0 %295
          %v297 = vrot.slane %v296, 4
          %v298 = vadd.f32 %v296, %v297
          %v299 = vrot.slane %v298, 2
          %v300 = vadd.f32 %v298, %v299
          %v301 = vrot.slane %v300, 1
          %v302 = vadd.f32 %v300, %v301
          %s303 = vtos %v302
          %v304 = vsel %vm291, %v278, 0.0
          %v305 = vsel %vm256, %v304, 0.0
          %306 = vadd.xlane.f32.xlu0 %v305
          %v307 = vpop.xlane.xlu0 %306
          %v308 = vrot.slane %v307, 4
          %v309 = vadd.f32 %v307, %v308
          %v310 = vrot.slane %v309, 2
          %v311 = vadd.f32 %v309, %v310
          %v312 = vrot.slane %v311, 1
          %v313 = vadd.f32 %v311, %v312
          %s314 = vtos %v313
          %v315 = vadd.s32 %v288, 8
          %vm316 = vcmp.lt.s32.totalorder %v288, 8
          %vm317 = vcmp.lt.s32.totalorder %v315, 8
          %v318 = vstv %s303
          %v319 = vstv %s314
          %v320 = vsel %vm316, %v318, %v319
          %v321 = vsel %vm317, %v318, %v319
          %322 = vst [vmem:[%s207] sm:$0xff] %v320
          %323 = vst [vmem:[%s207 + $0x8] sm:$0xff] %v321
        $region40: #{tpu_custom_call.1} parent=31 // pred_fallthru
          _
        %s324 = sand.u32 %s117, 1
        %s325 = scalar_lea.sflag [#allocation6], %s324
        %s326 = sand.u32 %s117, 1
        %s327 = smul.addr %s326, 16
        %s328 = scalar_lea.vmem [#allocation5], %s327
        // Predicated region
        $region41: #{tpu_custom_call.1} parent=31 // pred_check
          %p329 = pneg %p127
        $region42: #{tpu_custom_call.1} parent=31 // pred_check_branch
          %331 = sbr.rel (%p329) target = $region44
        $region43: #{tpu_custom_call.1} parent=31 // pred_region
          %s333 = ssub.s32 256, 256
          %334 = vsyncadd %s325, %s333
          %s335 = smul.addr %s21, 2
          %s336 = smul.addr %s335, 128
          %s337 = scalar_lea.hbm %s3, %s336
          %s338 = sshll.u32 %s328, 4
          %s339 = int_to_ptr.vmem [resolvable:$true] %s338
          %344 = dma.vmem_to_hbm [thread:$0]  %s339, 256, %s337, %s325, 128, 128, 8
        $region44: #{tpu_custom_call.1} parent=31 // pred_fallthru
          _
      $region32: #{tpu_custom_call.1} parent=5 // pred_fallthru
        _
      %p345 = scmp.le.s32.totalorder 2, %s12
      // Predicated region
      $region45: #{tpu_custom_call.1} parent=5 // pred_check
        %p346 = pneg %p345
      $region46: #{tpu_custom_call.1} parent=5 // pred_check_branch
        %348 = sbr.rel (%p346) target = $region48
      $region47: #{tpu_custom_call.1} parent=5 // pred_region
        %s349 = ssub.s32 %s12, 2
        // Predicated region
        $region49: #{tpu_custom_call.1} parent=47 // pred_check
          %p350 = pneg %p133
        $region50: #{tpu_custom_call.1} parent=47 // pred_check_branch
          %352 = sbr.rel (%p350) target = $region52
        $region51: #{tpu_custom_call.1} parent=47 // pred_region
          %s353 = sand.u32 %s118, 1
          %s354 = scalar_lea.sflag [#allocation6], %s353
          %s355 = sand.u32 %s118, 1
          %s356 = smul.addr %s355, 16
          %s357 = scalar_lea.vmem [#allocation5], %s356
          %358 = dma.done %s354, 256
        $region52: #{tpu_custom_call.1} parent=47 // pred_fallthru
          _
      $region48: #{tpu_custom_call.1} parent=5 // pred_fallthru
        _
    $region6: #{tpu_custom_call.1} parent=1 // loop_footer
      %s16 = sadd.s32 1, %s12
    $region7: #{tpu_custom_call.1} parent=1 // loop_footer_branch
      %11 = sbr.rel target = $region3
    $region8: #{tpu_custom_call.1} parent=1 // loop_exit
      _
    %359 = vsyncpa [#allocation6], 1
    %s360 = scalar_lea.sflag [#allocation6], 1
    %361 = vsyncpa %s360, 1

</llo_original>
